<compile_context>
chip_gen: v6e
topology: v6e:2x2x1
jax: 0.10.0
libtpu: 0.0.40
codegen_flags: <defaults>
</compile_context>

<pallas_src>
import jax
import jax.numpy as jnp
from jax.experimental import pallas as pl
from jax.experimental.pallas import tpu as pltpu


# ----------------------------------------------------------------------------
# Synthetic model configuration
# ----------------------------------------------------------------------------
BATCH = 2
FEAT = 32                                   # dim of f_t and f_ti
JOIN_NEURONS = [2 * FEAT, 64, FEAT]         # Join.after_process FC: 64 -> 64 -> 32
GROUP_SIZES = (5, 3, 2)                     # steer / throttle / brake class counts
NUM_ACTION_CLASS = sum(GROUP_SIZES)
DECODE_NEURONS = [FEAT, 32, NUM_ACTION_CLASS]   # decode FC: 32 -> 32 -> 10


# ----------------------------------------------------------------------------
# Fused Pallas kernel: join FC + decode FC + 3x weighted cross-entropy
# ----------------------------------------------------------------------------
def _inverse_model_kernel(f_t_ref, f_ti_ref, ac_ref,
                          w1a_ref, w1b_ref, b1_ref,
                          w2_ref, b2_ref,
                          w3_ref, b3_ref,
                          w4_ref, b4_ref,
                          cw_ref, loss_ref):
    f32 = jnp.float32
    f_t = f_t_ref[...]            # (B, FEAT)
    f_ti = f_ti_ref[...]          # (B, FEAT)

    # ---- Join: cat(f_t, f_ti) -> FC (end_layer=False => ReLU on every layer) ----
    # cat(f_t, f_ti) @ W1 == f_t @ W1[:FEAT] + f_ti @ W1[FEAT:]   (concat folded
    # into the matmul; no in-kernel concatenate / layout shuffle).
    # TODO(synk): Dropout layers are identity in eval mode and are omitted.
    h = (jnp.dot(f_t, w1a_ref[...], preferred_element_type=f32)
         + jnp.dot(f_ti, w1b_ref[...], preferred_element_type=f32)
         + b1_ref[...])
    h = jnp.maximum(h, 0.0)
    h = jnp.maximum(
        jnp.dot(h, w2_ref[...], preferred_element_type=f32) + b2_ref[...], 0.0)

    # ---- decode FC (end_layer=True => last layer is plain Linear) ----
    h = jnp.maximum(
        jnp.dot(h, w3_ref[...], preferred_element_type=f32) + b3_ref[...], 0.0)
    logits = jnp.dot(h, w4_ref[...], preferred_element_type=f32) + b4_ref[...]  # (B, NCLS)

    labels = ac_ref[...]          # (B, 3) int32 class indices (per group)
    class_w = cw_ref[...]         # (1, NCLS) per-class CE weights (groups concatenated)

    B, NCLS = logits.shape
    cls_iota = jax.lax.broadcasted_iota(jnp.int32, (B, NCLS), 1)          # (B, NCLS)
    grp_iota = jax.lax.broadcasted_iota(jnp.int32, labels.shape, 1)       # (B, 3)
    NEG = jnp.float32(-1e30)

    total = jnp.zeros((1, 1), f32)
    off = 0
    for g, size in enumerate(GROUP_SIZES):        # static unrolled loop (3 groups)
        # group membership mask over the full class axis (no lane slicing)
        in_group = jnp.logical_and(cls_iota >= off, cls_iota < off + size)
        lg = jnp.where(in_group, logits, NEG)                              # (B, NCLS)

        # stable log-sum-exp restricted to this group's classes
        m = jnp.max(lg, axis=-1, keepdims=True)                            # (B, 1)
        lse = m + jnp.log(jnp.sum(jnp.exp(lg - m), axis=-1, keepdims=True))

        # label for group g, selected with a mask (again no unaligned slicing)
        y_g = jnp.sum(jnp.where(grp_iota == g, labels, 0),
                      axis=-1, keepdims=True)                              # (B, 1)
        onehot = (cls_iota == (y_g + off)).astype(f32)                     # (B, NCLS)

        picked = jnp.sum(onehot * logits, axis=-1, keepdims=True)          # (B, 1)
        wsel = jnp.sum(onehot * class_w, axis=-1, keepdims=True)           # (B, 1)
        nll = lse - picked                                                 # (B, 1)

        # F.cross_entropy(weight=..., reduction='mean') = sum(w_y * nll) / sum(w_y)
        num = jnp.sum(wsel * nll, axis=0, keepdims=True)                   # (1, 1)
        den = jnp.sum(wsel, axis=0, keepdims=True)                         # (1, 1)
        total = total + num / den
        off += size

    loss_ref[...] = total


def inverse_model_forward(p, f_t, f_ti, a_c):
    """Fused forward: returns (loss, f_t, f_ti), matching the PyTorch module."""
    inputs = (f_t.astype(jnp.float32), f_ti.astype(jnp.float32),
              a_c.astype(jnp.int32),
              p["w1a"], p["w1b"], p["b1"],
              p["w2"], p["b2"],
              p["w3"], p["b3"],
              p["w4"], p["b4"],
              p["class_w"])
    # Everything fits trivially in VMEM -> gridless call, full arrays resident.
    loss2d = pl.pallas_call(
        _inverse_model_kernel,
        out_shape=jax.ShapeDtypeStruct((1, 1), jnp.float32),
        in_specs=[pl.BlockSpec(memory_space=pltpu.MemorySpace.VMEM)
                  for _ in inputs],
        out_specs=pl.BlockSpec(memory_space=pltpu.MemorySpace.VMEM),
    )(*inputs)
    # The module returns the (unchanged) input features alongside the loss.
    return loss2d[0, 0], f_t, f_ti


# ----------------------------------------------------------------------------
# Deterministic synthetic parameters
# ----------------------------------------------------------------------------
def make_params(key):
    ks = jax.random.split(key, 8)

    def w(k, shape, scale=0.1):
        return scale * jax.random.normal(k, shape, dtype=jnp.float32)

    n0, n1, n2 = JOIN_NEURONS
    d0, d1, d2 = DECODE_NEURONS
    w1 = w(ks[0], (n0, n1))
    class_w = jnp.concatenate([
        jnp.linspace(0.5, 1.5, GROUP_SIZES[0]),
        jnp.linspace(0.8, 1.2, GROUP_SIZES[1]),
        jnp.linspace(0.9, 1.1, GROUP_SIZES[2]),
    ]).astype(jnp.float32).reshape(1, NUM_ACTION_CLASS)
    return {
        "w1a": w1[:FEAT, :],                 # rows multiplying f_t
        "w1b": w1[FEAT:, :],                 # rows multiplying f_ti
        "b1": w(ks[1], (1, n1)),
        "w2": w(ks[2], (n1, n2)),
        "b2": w(ks[3], (1, n2)),
        "w3": w(ks[4], (d0, d1)),
        "b3": w(ks[5], (1, d1)),
        "w4": w(ks[6], (d1, d2)),
        "b4": w(ks[7], (1, d2)),
        "class_w": class_w,                  # g_conf.ACTION_VARIABLE_WEIGHT (concat)
    }


# ----------------------------------------------------------------------------
# Pure-JAX reference (sanity check only; not a Pallas kernel)
# ----------------------------------------------------------------------------
def _reference_forward(p, f_t, f_ti, a_c):
    x = jnp.concatenate([f_t, f_ti], axis=1)
    w1 = jnp.concatenate([p["w1a"], p["w1b"]], axis=0)
    h = jax.nn.relu(x @ w1 + p["b1"])
    h = jax.nn.relu(h @ p["w2"] + p["b2"])
    h = jax.nn.relu(h @ p["w3"] + p["b3"])
    logits = h @ p["w4"] + p["b4"]
    cw = p["class_w"][0]
    total = jnp.float32(0.0)
    start = 0
    for g, size in enumerate(GROUP_SIZES):
        lg = logits[:, start:start + size]
        y = a_c[:, g]
        logp = jax.nn.log_softmax(lg, axis=-1)
        nll = -jnp.take_along_axis(logp, y[:, None], axis=1)[:, 0]
        wsel = cw[start:start + size][y]
        total = total + jnp.sum(wsel * nll) / jnp.sum(wsel)
        start += size
    return total, f_t, f_ti


if __name__ == "__main__":
    key = jax.random.PRNGKey(0)
    kp, kf1, kf2, k_s, k_t, k_b = jax.random.split(key, 6)
    params = make_params(kp)

    f_t = jax.random.normal(kf1, (BATCH, FEAT), dtype=jnp.float32)
    f_ti = jax.random.normal(kf2, (BATCH, FEAT), dtype=jnp.float32)
    a_c = jnp.stack([
        jax.random.randint(k_s, (BATCH,), 0, GROUP_SIZES[0]),
        jax.random.randint(k_t, (BATCH,), 0, GROUP_SIZES[1]),
        jax.random.randint(k_b, (BATCH,), 0, GROUP_SIZES[2]),
    ], axis=1).astype(jnp.int32)

    fwd = jax.jit(inverse_model_forward)
    loss, f_t_out, f_ti_out = fwd(params, f_t, f_ti, a_c)
    jax.block_until_ready((loss, f_t_out, f_ti_out))

    # Sanity check against the pure-JAX reference.
    ref_loss, _, _ = _reference_forward(params, f_t, f_ti, a_c)
    assert loss.shape == ()
    assert bool(jnp.isfinite(loss))
    assert abs(float(loss) - float(ref_loss)) < 1e-3, (float(loss), float(ref_loss))
    assert f_t_out.shape == (BATCH, FEAT) and f_ti_out.shape == (BATCH, FEAT)
    print("KERNEL_OK")
</pallas_src>

<mosaic_0001>
module attributes {stable_mosaic.version = 11 : i64} {
  func.func @_inverse_model_kernel(%arg0: memref<2x32xf32, #tpu.memory_space<vmem>>, %arg1: memref<2x32xf32, #tpu.memory_space<vmem>>, %arg2: memref<2x3xi32, #tpu.memory_space<vmem>>, %arg3: memref<32x64xf32, #tpu.memory_space<vmem>>, %arg4: memref<32x64xf32, #tpu.memory_space<vmem>>, %arg5: memref<1x64xf32, #tpu.memory_space<vmem>>, %arg6: memref<64x32xf32, #tpu.memory_space<vmem>>, %arg7: memref<1x32xf32, #tpu.memory_space<vmem>>, %arg8: memref<32x32xf32, #tpu.memory_space<vmem>>, %arg9: memref<1x32xf32, #tpu.memory_space<vmem>>, %arg10: memref<32x10xf32, #tpu.memory_space<vmem>>, %arg11: memref<1x10xf32, #tpu.memory_space<vmem>>, %arg12: memref<1x10xf32, #tpu.memory_space<vmem>>, %arg13: memref<1x1xf32, #tpu.memory_space<vmem>>) attributes {dimension_semantics = [], scalar_prefetch = 0 : i64, scratch_operands = 0 : i64, tpu.core_type = #tpu.core_type<tc>} {
    %c0 = arith.constant 0 : index
    %c0_0 = arith.constant 0 : index
    %0 = vector.load %arg0[%c0, %c0_0] : memref<2x32xf32, #tpu.memory_space<vmem>>, vector<2x32xf32>
    %c0_1 = arith.constant 0 : index
    %c0_2 = arith.constant 0 : index
    %1 = vector.load %arg1[%c0_1, %c0_2] : memref<2x32xf32, #tpu.memory_space<vmem>>, vector<2x32xf32>
    %c0_3 = arith.constant 0 : index
    %c0_4 = arith.constant 0 : index
    %2 = vector.load %arg3[%c0_3, %c0_4] : memref<32x64xf32, #tpu.memory_space<vmem>>, vector<32x64xf32>
    %cst = arith.constant dense<0.000000e+00> : vector<2x64xf32>
    %3 = tpu.matmul %0, %2, %cst {dimension_numbers = #tpu.dot_dimension_numbers<[1], [0], [0], [1], [0, 0, 1, 1], [], []>} : vector<2x32xf32>, vector<32x64xf32>, vector<2x64xf32> -> vector<2x64xf32>
    %c0_5 = arith.constant 0 : index
    %c0_6 = arith.constant 0 : index
    %4 = vector.load %arg4[%c0_5, %c0_6] : memref<32x64xf32, #tpu.memory_space<vmem>>, vector<32x64xf32>
    %cst_7 = arith.constant dense<0.000000e+00> : vector<2x64xf32>
    %5 = tpu.matmul %1, %4, %cst_7 {dimension_numbers = #tpu.dot_dimension_numbers<[1], [0], [0], [1], [0, 0, 1, 1], [], []>} : vector<2x32xf32>, vector<32x64xf32>, vector<2x64xf32> -> vector<2x64xf32>
    %6 = arith.addf %3, %5 : vector<2x64xf32>
    %c0_8 = arith.constant 0 : index
    %c0_9 = arith.constant 0 : index
    %7 = vector.load %arg5[%c0_8, %c0_9] : memref<1x64xf32, #tpu.memory_space<vmem>>, vector<1x64xf32>
    %8 = vector.broadcast %7 : vector<1x64xf32> to vector<2x64xf32>
    %9 = arith.addf %6, %8 : vector<2x64xf32>
    %cst_10 = arith.constant 0.000000e+00 : f32
    %10 = vector.broadcast %cst_10 : f32 to vector<2x64xf32>
    %11 = arith.maximumf %9, %10 : vector<2x64xf32>
    %c0_11 = arith.constant 0 : index
    %c0_12 = arith.constant 0 : index
    %12 = vector.load %arg6[%c0_11, %c0_12] : memref<64x32xf32, #tpu.memory_space<vmem>>, vector<64x32xf32>
    %cst_13 = arith.constant dense<0.000000e+00> : vector<2x32xf32>
    %13 = tpu.matmul %11, %12, %cst_13 {dimension_numbers = #tpu.dot_dimension_numbers<[1], [0], [0], [1], [0, 0, 1, 1], [], []>} : vector<2x64xf32>, vector<64x32xf32>, vector<2x32xf32> -> vector<2x32xf32>
    %c0_14 = arith.constant 0 : index
    %c0_15 = arith.constant 0 : index
    %14 = vector.load %arg7[%c0_14, %c0_15] : memref<1x32xf32, #tpu.memory_space<vmem>>, vector<1x32xf32>
    %15 = vector.broadcast %14 : vector<1x32xf32> to vector<2x32xf32>
    %16 = arith.addf %13, %15 : vector<2x32xf32>
    %cst_16 = arith.constant 0.000000e+00 : f32
    %17 = vector.broadcast %cst_16 : f32 to vector<2x32xf32>
    %18 = arith.maximumf %16, %17 : vector<2x32xf32>
    %c0_17 = arith.constant 0 : index
    %c0_18 = arith.constant 0 : index
    %19 = vector.load %arg8[%c0_17, %c0_18] : memref<32x32xf32, #tpu.memory_space<vmem>>, vector<32x32xf32>
    %cst_19 = arith.constant dense<0.000000e+00> : vector<2x32xf32>
    %20 = tpu.matmul %18, %19, %cst_19 {dimension_numbers = #tpu.dot_dimension_numbers<[1], [0], [0], [1], [0, 0, 1, 1], [], []>} : vector<2x32xf32>, vector<32x32xf32>, vector<2x32xf32> -> vector<2x32xf32>
    %c0_20 = arith.constant 0 : index
    %c0_21 = arith.constant 0 : index
    %21 = vector.load %arg9[%c0_20, %c0_21] : memref<1x32xf32, #tpu.memory_space<vmem>>, vector<1x32xf32>
    %22 = vector.broadcast %21 : vector<1x32xf32> to vector<2x32xf32>
    %23 = arith.addf %20, %22 : vector<2x32xf32>
    %cst_22 = arith.constant 0.000000e+00 : f32
    %24 = vector.broadcast %cst_22 : f32 to vector<2x32xf32>
    %25 = arith.maximumf %23, %24 : vector<2x32xf32>
    %c0_23 = arith.constant 0 : index
    %c0_24 = arith.constant 0 : index
    %26 = vector.load %arg10[%c0_23, %c0_24] : memref<32x10xf32, #tpu.memory_space<vmem>>, vector<32x10xf32>
    %cst_25 = arith.constant dense<0.000000e+00> : vector<2x10xf32>
    %27 = tpu.matmul %25, %26, %cst_25 {dimension_numbers = #tpu.dot_dimension_numbers<[1], [0], [0], [1], [0, 0, 1, 1], [], []>} : vector<2x32xf32>, vector<32x10xf32>, vector<2x10xf32> -> vector<2x10xf32>
    %c0_26 = arith.constant 0 : index
    %c0_27 = arith.constant 0 : index
    %28 = vector.load %arg11[%c0_26, %c0_27] : memref<1x10xf32, #tpu.memory_space<vmem>>, vector<1x10xf32>
    %29 = vector.broadcast %28 : vector<1x10xf32> to vector<2x10xf32>
    %30 = arith.addf %27, %29 : vector<2x10xf32>
    %c0_28 = arith.constant 0 : index
    %c0_29 = arith.constant 0 : index
    %31 = vector.load %arg2[%c0_28, %c0_29] : memref<2x3xi32, #tpu.memory_space<vmem>>, vector<2x3xi32>
    %c0_30 = arith.constant 0 : index
    %c0_31 = arith.constant 0 : index
    %32 = vector.load %arg12[%c0_30, %c0_31] : memref<1x10xf32, #tpu.memory_space<vmem>>, vector<1x10xf32>
    %33 = tpu.iota {dimensions = array<i32: 1>} : vector<2x10xi32>
    %34 = tpu.iota {dimensions = array<i32: 1>} : vector<2x3xi32>
    %cst_32 = arith.constant 0.000000e+00 : f32
    %35 = vector.broadcast %cst_32 : f32 to vector<1x1xf32>
    %c0_i32 = arith.constant 0 : i32
    %36 = vector.broadcast %c0_i32 : i32 to vector<2x10xi32>
    %37 = arith.cmpi sge, %33, %36 : vector<2x10xi32>
    %c5_i32 = arith.constant 5 : i32
    %38 = vector.broadcast %c5_i32 : i32 to vector<2x10xi32>
    %39 = arith.cmpi slt, %33, %38 : vector<2x10xi32>
    %40 = arith.andi %37, %39 : vector<2x10xi1>
    %cst_33 = arith.constant -1.000000e+30 : f32
    %41 = vector.broadcast %cst_33 : f32 to vector<2x10xf32>
    %42 = arith.select %40, %30, %41 : vector<2x10xi1>, vector<2x10xf32>
    %cst_34 = arith.constant dense<0xFF800000> : vector<2xf32>
    %43 = vector.multi_reduction <maximumf>, %42, %cst_34 [1] : vector<2x10xf32> to vector<2xf32>
    %44 = vector.shape_cast %43 : vector<2xf32> to vector<2x1xf32>
    %45 = vector.broadcast %44 : vector<2x1xf32> to vector<2x10xf32>
    %46 = arith.subf %42, %45 : vector<2x10xf32>
    %47 = math.exp %46 : vector<2x10xf32>
    %cst_35 = arith.constant dense<0.000000e+00> : vector<2xf32>
    %48 = vector.multi_reduction <add>, %47, %cst_35 [1] : vector<2x10xf32> to vector<2xf32>
    %49 = vector.shape_cast %48 : vector<2xf32> to vector<2x1xf32>
    %50 = math.log %49 : vector<2x1xf32>
    %51 = arith.addf %44, %50 : vector<2x1xf32>
    %c0_i32_36 = arith.constant 0 : i32
    %52 = vector.broadcast %c0_i32_36 : i32 to vector<2x3xi32>
    %53 = arith.cmpi eq, %34, %52 : vector<2x3xi32>
    %c0_i32_37 = arith.constant 0 : i32
    %54 = vector.broadcast %c0_i32_37 : i32 to vector<2x3xi32>
    %55 = arith.select %53, %31, %54 : vector<2x3xi1>, vector<2x3xi32>
    %cst_38 = arith.constant dense<0> : vector<2xi32>
    %56 = vector.multi_reduction <add>, %55, %cst_38 [1] : vector<2x3xi32> to vector<2xi32>
    %57 = vector.shape_cast %56 : vector<2xi32> to vector<2x1xi32>
    %c0_i32_39 = arith.constant 0 : i32
    %58 = vector.broadcast %c0_i32_39 : i32 to vector<2x1xi32>
    %59 = arith.addi %57, %58 : vector<2x1xi32>
    %60 = vector.broadcast %59 : vector<2x1xi32> to vector<2x10xi32>
    %61 = arith.cmpi eq, %33, %60 : vector<2x10xi32>
    %62 = arith.extui %61 : vector<2x10xi1> to vector<2x10xi32>
    %63 = arith.sitofp %62 : vector<2x10xi32> to vector<2x10xf32>
    %64 = arith.mulf %63, %30 : vector<2x10xf32>
    %cst_40 = arith.constant dense<0.000000e+00> : vector<2xf32>
    %65 = vector.multi_reduction <add>, %64, %cst_40 [1] : vector<2x10xf32> to vector<2xf32>
    %66 = vector.shape_cast %65 : vector<2xf32> to vector<2x1xf32>
    %67 = vector.broadcast %32 : vector<1x10xf32> to vector<2x10xf32>
    %68 = arith.mulf %63, %67 : vector<2x10xf32>
    %cst_41 = arith.constant dense<0.000000e+00> : vector<2xf32>
    %69 = vector.multi_reduction <add>, %68, %cst_41 [1] : vector<2x10xf32> to vector<2xf32>
    %70 = vector.shape_cast %69 : vector<2xf32> to vector<2x1xf32>
    %71 = arith.subf %51, %66 : vector<2x1xf32>
    %72 = arith.mulf %70, %71 : vector<2x1xf32>
    %cst_42 = arith.constant dense<0.000000e+00> : vector<1xf32>
    %73 = vector.multi_reduction <add>, %72, %cst_42 [0] : vector<2x1xf32> to vector<1xf32>
    %74 = vector.shape_cast %73 : vector<1xf32> to vector<1x1xf32>
    %cst_43 = arith.constant dense<0.000000e+00> : vector<1xf32>
    %75 = vector.multi_reduction <add>, %70, %cst_43 [0] : vector<2x1xf32> to vector<1xf32>
    %76 = vector.shape_cast %75 : vector<1xf32> to vector<1x1xf32>
    %77 = arith.divf %74, %76 : vector<1x1xf32>
    %78 = arith.addf %35, %77 : vector<1x1xf32>
    %c5_i32_44 = arith.constant 5 : i32
    %79 = vector.broadcast %c5_i32_44 : i32 to vector<2x10xi32>
    %80 = arith.cmpi sge, %33, %79 : vector<2x10xi32>
    %c8_i32 = arith.constant 8 : i32
    %81 = vector.broadcast %c8_i32 : i32 to vector<2x10xi32>
    %82 = arith.cmpi slt, %33, %81 : vector<2x10xi32>
    %83 = arith.andi %80, %82 : vector<2x10xi1>
    %cst_45 = arith.constant -1.000000e+30 : f32
    %84 = vector.broadcast %cst_45 : f32 to vector<2x10xf32>
    %85 = arith.select %83, %30, %84 : vector<2x10xi1>, vector<2x10xf32>
    %cst_46 = arith.constant dense<0xFF800000> : vector<2xf32>
    %86 = vector.multi_reduction <maximumf>, %85, %cst_46 [1] : vector<2x10xf32> to vector<2xf32>
    %87 = vector.shape_cast %86 : vector<2xf32> to vector<2x1xf32>
    %88 = vector.broadcast %87 : vector<2x1xf32> to vector<2x10xf32>
    %89 = arith.subf %85, %88 : vector<2x10xf32>
    %90 = math.exp %89 : vector<2x10xf32>
    %cst_47 = arith.constant dense<0.000000e+00> : vector<2xf32>
    %91 = vector.multi_reduction <add>, %90, %cst_47 [1] : vector<2x10xf32> to vector<2xf32>
    %92 = vector.shape_cast %91 : vector<2xf32> to vector<2x1xf32>
    %93 = math.log %92 : vector<2x1xf32>
    %94 = arith.addf %87, %93 : vector<2x1xf32>
    %c1_i32 = arith.constant 1 : i32
    %95 = vector.broadcast %c1_i32 : i32 to vector<2x3xi32>
    %96 = arith.cmpi eq, %34, %95 : vector<2x3xi32>
    %c0_i32_48 = arith.constant 0 : i32
    %97 = vector.broadcast %c0_i32_48 : i32 to vector<2x3xi32>
    %98 = arith.select %96, %31, %97 : vector<2x3xi1>, vector<2x3xi32>
    %cst_49 = arith.constant dense<0> : vector<2xi32>
    %99 = vector.multi_reduction <add>, %98, %cst_49 [1] : vector<2x3xi32> to vector<2xi32>
    %100 = vector.shape_cast %99 : vector<2xi32> to vector<2x1xi32>
    %c5_i32_50 = arith.constant 5 : i32
    %101 = vector.broadcast %c5_i32_50 : i32 to vector<2x1xi32>
    %102 = arith.addi %100, %101 : vector<2x1xi32>
    %103 = vector.broadcast %102 : vector<2x1xi32> to vector<2x10xi32>
    %104 = arith.cmpi eq, %33, %103 : vector<2x10xi32>
    %105 = arith.extui %104 : vector<2x10xi1> to vector<2x10xi32>
    %106 = arith.sitofp %105 : vector<2x10xi32> to vector<2x10xf32>
    %107 = arith.mulf %106, %30 : vector<2x10xf32>
    %cst_51 = arith.constant dense<0.000000e+00> : vector<2xf32>
    %108 = vector.multi_reduction <add>, %107, %cst_51 [1] : vector<2x10xf32> to vector<2xf32>
    %109 = vector.shape_cast %108 : vector<2xf32> to vector<2x1xf32>
    %110 = vector.broadcast %32 : vector<1x10xf32> to vector<2x10xf32>
    %111 = arith.mulf %106, %110 : vector<2x10xf32>
    %cst_52 = arith.constant dense<0.000000e+00> : vector<2xf32>
    %112 = vector.multi_reduction <add>, %111, %cst_52 [1] : vector<2x10xf32> to vector<2xf32>
    %113 = vector.shape_cast %112 : vector<2xf32> to vector<2x1xf32>
    %114 = arith.subf %94, %109 : vector<2x1xf32>
    %115 = arith.mulf %113, %114 : vector<2x1xf32>
    %cst_53 = arith.constant dense<0.000000e+00> : vector<1xf32>
    %116 = vector.multi_reduction <add>, %115, %cst_53 [0] : vector<2x1xf32> to vector<1xf32>
    %117 = vector.shape_cast %116 : vector<1xf32> to vector<1x1xf32>
    %cst_54 = arith.constant dense<0.000000e+00> : vector<1xf32>
    %118 = vector.multi_reduction <add>, %113, %cst_54 [0] : vector<2x1xf32> to vector<1xf32>
    %119 = vector.shape_cast %118 : vector<1xf32> to vector<1x1xf32>
    %120 = arith.divf %117, %119 : vector<1x1xf32>
    %121 = arith.addf %78, %120 : vector<1x1xf32>
    %c8_i32_55 = arith.constant 8 : i32
    %122 = vector.broadcast %c8_i32_55 : i32 to vector<2x10xi32>
    %123 = arith.cmpi sge, %33, %122 : vector<2x10xi32>
    %c10_i32 = arith.constant 10 : i32
    %124 = vector.broadcast %c10_i32 : i32 to vector<2x10xi32>
    %125 = arith.cmpi slt, %33, %124 : vector<2x10xi32>
    %126 = arith.andi %123, %125 : vector<2x10xi1>
    %cst_56 = arith.constant -1.000000e+30 : f32
    %127 = vector.broadcast %cst_56 : f32 to vector<2x10xf32>
    %128 = arith.select %126, %30, %127 : vector<2x10xi1>, vector<2x10xf32>
    %cst_57 = arith.constant dense<0xFF800000> : vector<2xf32>
    %129 = vector.multi_reduction <maximumf>, %128, %cst_57 [1] : vector<2x10xf32> to vector<2xf32>
    %130 = vector.shape_cast %129 : vector<2xf32> to vector<2x1xf32>
    %131 = vector.broadcast %130 : vector<2x1xf32> to vector<2x10xf32>
    %132 = arith.subf %128, %131 : vector<2x10xf32>
    %133 = math.exp %132 : vector<2x10xf32>
    %cst_58 = arith.constant dense<0.000000e+00> : vector<2xf32>
    %134 = vector.multi_reduction <add>, %133, %cst_58 [1] : vector<2x10xf32> to vector<2xf32>
    %135 = vector.shape_cast %134 : vector<2xf32> to vector<2x1xf32>
    %136 = math.log %135 : vector<2x1xf32>
    %137 = arith.addf %130, %136 : vector<2x1xf32>
    %c2_i32 = arith.constant 2 : i32
    %138 = vector.broadcast %c2_i32 : i32 to vector<2x3xi32>
    %139 = arith.cmpi eq, %34, %138 : vector<2x3xi32>
    %c0_i32_59 = arith.constant 0 : i32
    %140 = vector.broadcast %c0_i32_59 : i32 to vector<2x3xi32>
    %141 = arith.select %139, %31, %140 : vector<2x3xi1>, vector<2x3xi32>
    %cst_60 = arith.constant dense<0> : vector<2xi32>
    %142 = vector.multi_reduction <add>, %141, %cst_60 [1] : vector<2x3xi32> to vector<2xi32>
    %143 = vector.shape_cast %142 : vector<2xi32> to vector<2x1xi32>
    %c8_i32_61 = arith.constant 8 : i32
    %144 = vector.broadcast %c8_i32_61 : i32 to vector<2x1xi32>
    %145 = arith.addi %143, %144 : vector<2x1xi32>
    %146 = vector.broadcast %145 : vector<2x1xi32> to vector<2x10xi32>
    %147 = arith.cmpi eq, %33, %146 : vector<2x10xi32>
    %148 = arith.extui %147 : vector<2x10xi1> to vector<2x10xi32>
    %149 = arith.sitofp %148 : vector<2x10xi32> to vector<2x10xf32>
    %150 = arith.mulf %149, %30 : vector<2x10xf32>
    %cst_62 = arith.constant dense<0.000000e+00> : vector<2xf32>
    %151 = vector.multi_reduction <add>, %150, %cst_62 [1] : vector<2x10xf32> to vector<2xf32>
    %152 = vector.shape_cast %151 : vector<2xf32> to vector<2x1xf32>
    %153 = vector.broadcast %32 : vector<1x10xf32> to vector<2x10xf32>
    %154 = arith.mulf %149, %153 : vector<2x10xf32>
    %cst_63 = arith.constant dense<0.000000e+00> : vector<2xf32>
    %155 = vector.multi_reduction <add>, %154, %cst_63 [1] : vector<2x10xf32> to vector<2xf32>
    %156 = vector.shape_cast %155 : vector<2xf32> to vector<2x1xf32>
    %157 = arith.subf %137, %152 : vector<2x1xf32>
    %158 = arith.mulf %156, %157 : vector<2x1xf32>
    %cst_64 = arith.constant dense<0.000000e+00> : vector<1xf32>
    %159 = vector.multi_reduction <add>, %158, %cst_64 [0] : vector<2x1xf32> to vector<1xf32>
    %160 = vector.shape_cast %159 : vector<1xf32> to vector<1x1xf32>
    %cst_65 = arith.constant dense<0.000000e+00> : vector<1xf32>
    %161 = vector.multi_reduction <add>, %156, %cst_65 [0] : vector<2x1xf32> to vector<1xf32>
    %162 = vector.shape_cast %161 : vector<1xf32> to vector<1x1xf32>
    %163 = arith.divf %160, %162 : vector<1x1xf32>
    %164 = arith.addf %121, %163 : vector<1x1xf32>
    %c0_66 = arith.constant 0 : index
    %c0_67 = arith.constant 0 : index
    %165 = vector.load %arg13[%c0_66, %c0_67] : memref<1x1xf32, #tpu.memory_space<vmem>>, vector<1x1xf32>
    tpu.vector_store %arg13[%c0_66, %c0_67], %164 {strides = array<i32>} : memref<1x1xf32, #tpu.memory_space<vmem>>, vector<1x1xf32>,
    return
  }
}

</mosaic_0001>

<llo_original>
// kernel: inverse_model_forward.1
$region0: #{inverse_model_forward.1}
  #allocation0 [shape = 'u32[]', space=smem, size = 0x4, offset = 0x4, fixed_abs, tag = 'smem constant byte address 0x4 - core index']
  #allocation1 [shape = 'u32[144,128]{1,0:T(1,128)}', space=vmem, size = 0x12000, scoped, tag = 'internal scratch']
  %s0 = inlined_call_operand.vmem [shape: f32[2,32], index: 0, kind: input, shape index: {}]
  %s1 = inlined_call_operand.vmem [shape: f32[2,32], index: 1, kind: input, shape index: {}]
  %s2 = inlined_call_operand.vmem [shape: s32[2,3], index: 2, kind: input, shape index: {}]
  %s3 = inlined_call_operand.vmem [shape: f32[32,64], index: 3, kind: input, shape index: {}]
  %s4 = inlined_call_operand.vmem [shape: f32[32,64], index: 4, kind: input, shape index: {}]
  %s5 = inlined_call_operand.vmem [shape: f32[1,64], index: 5, kind: input, shape index: {}]
  %s6 = inlined_call_operand.vmem [shape: f32[64,32], index: 6, kind: input, shape index: {}]
  %s7 = inlined_call_operand.vmem [shape: f32[1,32], index: 7, kind: input, shape index: {}]
  %s8 = inlined_call_operand.vmem [shape: f32[32,32], index: 8, kind: input, shape index: {}]
  %s9 = inlined_call_operand.vmem [shape: f32[1,32], index: 9, kind: input, shape index: {}]
  %s10 = inlined_call_operand.vmem [shape: f32[32,10], index: 10, kind: input, shape index: {}]
  %s11 = inlined_call_operand.vmem [shape: f32[1,10], index: 11, kind: input, shape index: {}]
  %s12 = inlined_call_operand.vmem [shape: f32[1,10], index: 12, kind: input, shape index: {}]
  %s13 = inlined_call_operand.hbm [shape: f32[1,1], index: 13, kind: output, shape index: {}]
  %s14 = sld [smem:[#allocation0]]
  $region62: #{inverse_model_forward.1} parent=0
    _
  %s16 = ssub.s32 1, %s14
  %s17 = scalar_select 0, %s16, %s14
  $region1: #{inverse_model_forward.1} parent=0
    #allocation2 [shape = 'u8[512]{0}', space=vmem, size = 0x400, scoped, tag = 'output window, operand 0, single buffered']
    #allocation3 [shape = 's32[1]{0}', space=sflag, size = 0x4, scoped, tag = 'scoped memory for inverse_model_forward.1']
    %18 = vsyncpa [#allocation3], 0
    // Predicated region
    $region2: #{inverse_model_forward.1} parent=1 // pred_check
      _
    $region3: #{inverse_model_forward.1} parent=1 // pred_check_branch
      %20 = sbr.rel (0) target = $region5
    $region4: #{inverse_model_forward.1} parent=1 // pred_region
      _
    $region5: #{inverse_model_forward.1} parent=1 // pred_fallthru
      _
    // Predicated region
    $region6: #{inverse_model_forward.1} parent=1 // pred_check
      _
    $region7: #{inverse_model_forward.1} parent=1 // pred_check_branch
      %22 = sbr.rel (0) target = $region9
    $region8: #{inverse_model_forward.1} parent=1 // pred_region
      _
    $region9: #{inverse_model_forward.1} parent=1 // pred_fallthru
      _
    // Predicated region
    $region10: #{inverse_model_forward.1} parent=1 // pred_check
      _
    $region11: #{inverse_model_forward.1} parent=1 // pred_check_branch
      %24 = sbr.rel (0) target = $region13
    $region12: #{inverse_model_forward.1} parent=1 // pred_region
      _
    $region13: #{inverse_model_forward.1} parent=1 // pred_fallthru
      _
    // Predicated region
    $region14: #{inverse_model_forward.1} parent=1 // pred_check
      _
    $region15: #{inverse_model_forward.1} parent=1 // pred_check_branch
      %26 = sbr.rel (0) target = $region17
    $region16: #{inverse_model_forward.1} parent=1 // pred_region
      _
    $region17: #{inverse_model_forward.1} parent=1 // pred_fallthru
      _
    // Predicated region
    $region18: #{inverse_model_forward.1} parent=1 // pred_check
      _
    $region19: #{inverse_model_forward.1} parent=1 // pred_check_branch
      %28 = sbr.rel (0) target = $region21
    $region20: #{inverse_model_forward.1} parent=1 // pred_region
      _
    $region21: #{inverse_model_forward.1} parent=1 // pred_fallthru
      _
    // Predicated region
    $region22: #{inverse_model_forward.1} parent=1 // pred_check
      _
    $region23: #{inverse_model_forward.1} parent=1 // pred_check_branch
      %30 = sbr.rel (0) target = $region25
    $region24: #{inverse_model_forward.1} parent=1 // pred_region
      _
    $region25: #{inverse_model_forward.1} parent=1 // pred_fallthru
      _
    // Predicated region
    $region26: #{inverse_model_forward.1} parent=1 // pred_check
      _
    $region27: #{inverse_model_forward.1} parent=1 // pred_check_branch
      %32 = sbr.rel (0) target = $region29
    $region28: #{inverse_model_forward.1} parent=1 // pred_region
      _
    $region29: #{inverse_model_forward.1} parent=1 // pred_fallthru
      _
    // Predicated region
    $region30: #{inverse_model_forward.1} parent=1 // pred_check
      _
    $region31: #{inverse_model_forward.1} parent=1 // pred_check_branch
      %34 = sbr.rel (0) target = $region33
    $region32: #{inverse_model_forward.1} parent=1 // pred_region
      _
    $region33: #{inverse_model_forward.1} parent=1 // pred_fallthru
      _
    // Predicated region
    $region34: #{inverse_model_forward.1} parent=1 // pred_check
      _
    $region35: #{inverse_model_forward.1} parent=1 // pred_check_branch
      %36 = sbr.rel (0) target = $region37
    $region36: #{inverse_model_forward.1} parent=1 // pred_region
      _
    $region37: #{inverse_model_forward.1} parent=1 // pred_fallthru
      _
    // Predicated region
    $region38: #{inverse_model_forward.1} parent=1 // pred_check
      _
    $region39: #{inverse_model_forward.1} parent=1 // pred_check_branch
      %38 = sbr.rel (0) target = $region41
    $region40: #{inverse_model_forward.1} parent=1 // pred_region
      _
    $region41: #{inverse_model_forward.1} parent=1 // pred_fallthru
      _
    // Predicated region
    $region42: #{inverse_model_forward.1} parent=1 // pred_check
      _
    $region43: #{inverse_model_forward.1} parent=1 // pred_check_branch
      %40 = sbr.rel (0) target = $region45
    $region44: #{inverse_model_forward.1} parent=1 // pred_region
      _
    $region45: #{inverse_model_forward.1} parent=1 // pred_fallthru
      _
    // Predicated region
    $region46: #{inverse_model_forward.1} parent=1 // pred_check
      _
    $region47: #{inverse_model_forward.1} parent=1 // pred_check_branch
      %42 = sbr.rel (0) target = $region49
    $region48: #{inverse_model_forward.1} parent=1 // pred_region
      _
    $region49: #{inverse_model_forward.1} parent=1 // pred_fallthru
      _
    // Predicated region
    $region50: #{inverse_model_forward.1} parent=1 // pred_check
      _
    $region51: #{inverse_model_forward.1} parent=1 // pred_check_branch
      %44 = sbr.rel (0) target = $region53
    $region52: #{inverse_model_forward.1} parent=1 // pred_region
      _
    $region53: #{inverse_model_forward.1} parent=1 // pred_fallthru
      _
    %v45 = vld [vmem:[%s0] sm:$0x3]
    %v46 = vld [vmem:[%s1] sm:$0x3]
    %v47 = vld [vmem:[%s3] sm:$0xff]
    %v48 = vld [vmem:[%s3 + $0x8] sm:$0xff]
    %v49 = vld [vmem:[%s3 + $0x10] sm:$0xff]
    %v50 = vld [vmem:[%s3 + $0x18] sm:$0xff]
    %v51 = vld [vmem:[%s4] sm:$0xff]
    %v52 = vld [vmem:[%s4 + $0x8] sm:$0xff]
    %v53 = vld [vmem:[%s4 + $0x10] sm:$0xff]
    %v54 = vld [vmem:[%s4 + $0x18] sm:$0xff]
    %vm55 = vcmask 261120
    %v57 = vsel %vm55, %v46, 0
    %59 = vmatprep.subr.mxu0 0.0
    %60 = vmatpush1.msra.mxu0 0.0
    %61 = vmatprep.subr.mxu0 0.0
    %62 = vmatpush1.msra.mxu0 0.0
    %63 = vmatprep.subr.mxu0 0.0
    %64 = vmatpush1.msra.mxu0 0.0
    %65 = vmatprep.subr.mxu0 0.0
    %66 = vmatpush1.msra.mxu0 0.0
    %67 = vmatprep.subr.mxu0 0.0
    %68 = vmatpush1.msra.mxu0 0.0
    %69 = vmatprep.subr.mxu0 0.0
    %70 = vmatpush1.msra.mxu0 0.0
    %71 = vmatprep.subr.mxu0 0.0
    %72 = vmatpush1.msra.mxu0 0.0
    %73 = vmatprep.subr.mxu0 0.0
    %74 = vmatpush1.msra.mxu0 0.0
    %75 = vmatprep.subr.mxu0 0.0
    %76 = vmatpush1.msra.mxu0 0.0
    %77 = vmatprep.subr.mxu0 0.0
    %78 = vmatpush1.msra.mxu0 0.0
    %79 = vmatprep.subr.mxu0 0.0
    %80 = vmatpush1.msra.mxu0 0.0
    %81 = vmatprep.subr.mxu0 0.0
    %82 = vmatpush1.msra.mxu0 0.0
    %83 = vmatprep.subr.mxu0 0.0
    %84 = vmatpush1.msra.mxu0 %v54
    %85 = vmatprep.subr.mxu0 0.0
    %86 = vmatpush1.msra.mxu0 %v53
    %87 = vmatprep.subr.mxu0 0.0
    %88 = vmatpush1.msra.mxu0 %v52
    %89 = vmatprep.subr.mxu0 0.0
    %90 = vmatpush1.msra.mxu0 %v51
    %91 = vmatprep.subr.mxu0 0.0
    %92 = vmatpush2.msra.mxu0 0.0
    %93 = vmatprep.subr.mxu0 0.0
    %94 = vmatpush2.msra.mxu0 0.0
    %95 = vmatprep.subr.mxu0 0.0
    %96 = vmatpush2.msra.mxu0 0.0
    %97 = vmatprep.subr.mxu0 0.0
    %98 = vmatpush2.msra.mxu0 0.0
    %99 = vmatprep.subr.mxu0 0.0
    %100 = vmatpush2.msra.mxu0 0.0
    %101 = vmatprep.subr.mxu0 0.0
    %102 = vmatpush2.msra.mxu0 0.0
    %103 = vmatprep.subr.mxu0 0.0
    %104 = vmatpush2.msra.mxu0 0.0
    %105 = vmatprep.subr.mxu0 0.0
    %106 = vmatpush2.msra.mxu0 0.0
    %107 = vmatprep.subr.mxu0 0.0
    %108 = vmatpush2.msra.mxu0 0.0
    %109 = vmatprep.subr.mxu0 0.0
    %110 = vmatpush2.msra.mxu0 0.0
    %111 = vmatprep.subr.mxu0 0.0
    %112 = vmatpush2.msra.mxu0 0.0
    %113 = vmatprep.subr.mxu0 0.0
    %114 = vmatpush2.msra.mxu0 0.0
    %115 = vmatprep.subr.mxu0 0.0
    %116 = vmatpush2.msra.mxu0 0.0
    %117 = vmatprep.subr.mxu0 0.0
    %118 = vmatpush2.msra.mxu0 0.0
    %119 = vmatprep.subr.mxu0 0.0
    %120 = vmatpush2.msra.mxu0 0.0
    %121 = vmatprep.subr.mxu0 0.0
    %122 = vmatpush2.msra.mxu0 0.0
    %123 = vmatprep.mubr.f32.mxu0 0.0
    %124 = vmatmul.mubr.f32.gmra.mxu0 %v57
    %v125 = vpop.f32.mrf.mxu0
    %v126 = vadd.f32 0.0, %v125
    %v127 = vpop.f32.mrf.mxu0
    %128 = vdwg.mxu0
    %v130 = vsel %vm55, %v45, 0
    %132 = vmatprep.subr.mxu0 0.0
    %133 = vmatpush1.msra.mxu0 0.0
    %134 = vmatprep.subr.mxu0 0.0
    %135 = vmatpush1.msra.mxu0 0.0
    %136 = vmatprep.subr.mxu0 0.0
    %137 = vmatpush1.msra.mxu0 0.0
    %138 = vmatprep.subr.mxu0 0.0
    %139 = vmatpush1.msra.mxu0 0.0
    %140 = vmatprep.subr.mxu0 0.0
    %141 = vmatpush1.msra.mxu0 0.0
    %142 = vmatprep.subr.mxu0 0.0
    %143 = vmatpush1.msra.mxu0 0.0
    %144 = vmatprep.subr.mxu0 0.0
    %145 = vmatpush1.msra.mxu0 0.0
    %146 = vmatprep.subr.mxu0 0.0
    %147 = vmatpush1.msra.mxu0 0.0
    %148 = vmatprep.subr.mxu0 0.0
    %149 = vmatpush1.msra.mxu0 0.0
    %150 = vmatprep.subr.mxu0 0.0
    %151 = vmatpush1.msra.mxu0 0.0
    %152 = vmatprep.subr.mxu0 0.0
    %153 = vmatpush1.msra.mxu0 0.0
    %154 = vmatprep.subr.mxu0 0.0
    %155 = vmatpush1.msra.mxu0 0.0
    %156 = vmatprep.subr.mxu0 0.0
    %157 = vmatpush1.msra.mxu0 %v50
    %158 = vmatprep.subr.mxu0 0.0
    %159 = vmatpush1.msra.mxu0 %v49
    %160 = vmatprep.subr.mxu0 0.0
    %161 = vmatpush1.msra.mxu0 %v48
    %162 = vmatprep.subr.mxu0 0.0
    %163 = vmatpush1.msra.mxu0 %v47
    %164 = vmatprep.subr.mxu0 0.0
    %165 = vmatpush2.msra.mxu0 0.0
    %166 = vmatprep.subr.mxu0 0.0
    %167 = vmatpush2.msra.mxu0 0.0
    %168 = vmatprep.subr.mxu0 0.0
    %169 = vmatpush2.msra.mxu0 0.0
    %170 = vmatprep.subr.mxu0 0.0
    %171 = vmatpush2.msra.mxu0 0.0
    %172 = vmatprep.subr.mxu0 0.0
    %173 = vmatpush2.msra.mxu0 0.0
    %174 = vmatprep.subr.mxu0 0.0
    %175 = vmatpush2.msra.mxu0 0.0
    %176 = vmatprep.subr.mxu0 0.0
    %177 = vmatpush2.msra.mxu0 0.0
    %178 = vmatprep.subr.mxu0 0.0
    %179 = vmatpush2.msra.mxu0 0.0
    %180 = vmatprep.subr.mxu0 0.0
    %181 = vmatpush2.msra.mxu0 0.0
    %182 = vmatprep.subr.mxu0 0.0
    %183 = vmatpush2.msra.mxu0 0.0
    %184 = vmatprep.subr.mxu0 0.0
    %185 = vmatpush2.msra.mxu0 0.0
    %186 = vmatprep.subr.mxu0 0.0
    %187 = vmatpush2.msra.mxu0 0.0
    %188 = vmatprep.subr.mxu0 0.0
    %189 = vmatpush2.msra.mxu0 0.0
    %190 = vmatprep.subr.mxu0 0.0
    %191 = vmatpush2.msra.mxu0 0.0
    %192 = vmatprep.subr.mxu0 0.0
    %193 = vmatpush2.msra.mxu0 0.0
    %194 = vmatprep.subr.mxu0 0.0
    %195 = vmatpush2.msra.mxu0 0.0
    %196 = vmatprep.mubr.f32.mxu0 0.0
    %197 = vmatmul.mubr.f32.gmra.mxu0 %v130
    %v198 = vpop.f32.mrf.mxu0
    %v199 = vadd.f32 %v126, %v198
    %v200 = vpop.f32.mrf.mxu0
    %201 = vdwg.mxu0
    %v202 = vld [vmem:[%s5] sm:$0x1]
    %v204 = vlaneseq
    %v205 = vshrl.u32 %v204, 7
    %v206 = vsub.s32 0, %v205
    %v207 = vrot.slane %v202, %v206
    %v209 = vadd.f32 %v199, %v207
    %v210 = vmax.f32 %v209, 0.0
    %v211 = vld [vmem:[%s6] sm:$0xff]
    %v212 = vld [vmem:[%s6 + $0x8] sm:$0xff]
    %v213 = vld [vmem:[%s6 + $0x10] sm:$0xff]
    %v214 = vld [vmem:[%s6 + $0x18] sm:$0xff]
    %v215 = vld [vmem:[%s6 + $0x20] sm:$0xff]
    %v216 = vld [vmem:[%s6 + $0x28] sm:$0xff]
    %v217 = vld [vmem:[%s6 + $0x30] sm:$0xff]
    %v218 = vld [vmem:[%s6 + $0x38] sm:$0xff]
    %v219 = vld [vmem:[%s7] sm:$0x1]
    %v221 = vlaneseq
    %v222 = vshrl.u32 %v221, 7
    %v223 = vsub.s32 0, %v222
    %v224 = vrot.slane %v219, %v223
    %vm226 = vcmask 523264
    %v228 = vsel %vm226, %v210, 0
    %230 = vmatprep.subr.mxu0 0.0
    %231 = vmatpush1.msra.mxu0 0.0
    %232 = vmatprep.subr.mxu0 0.0
    %233 = vmatpush1.msra.mxu0 0.0
    %234 = vmatprep.subr.mxu0 0.0
    %235 = vmatpush1.msra.mxu0 0.0
    %236 = vmatprep.subr.mxu0 0.0
    %237 = vmatpush1.msra.mxu0 0.0
    %238 = vmatprep.subr.mxu0 0.0
    %239 = vmatpush1.msra.mxu0 0.0
    %240 = vmatprep.subr.mxu0 0.0
    %241 = vmatpush1.msra.mxu0 0.0
    %242 = vmatprep.subr.mxu0 0.0
    %243 = vmatpush1.msra.mxu0 0.0
    %244 = vmatprep.subr.mxu0 0.0
    %245 = vmatpush1.msra.mxu0 0.0
    %246 = vmatprep.subr.mxu0 0.0
    %247 = vmatpush1.msra.mxu0 %v218
    %248 = vmatprep.subr.mxu0 0.0
    %249 = vmatpush1.msra.mxu0 %v217
    %250 = vmatprep.subr.mxu0 0.0
    %251 = vmatpush1.msra.mxu0 %v216
    %252 = vmatprep.subr.mxu0 0.0
    %253 = vmatpush1.msra.mxu0 %v215
    %254 = vmatprep.subr.mxu0 0.0
    %255 = vmatpush1.msra.mxu0 %v214
    %256 = vmatprep.subr.mxu0 0.0
    %257 = vmatpush1.msra.mxu0 %v213
    %258 = vmatprep.subr.mxu0 0.0
    %259 = vmatpush1.msra.mxu0 %v212
    %260 = vmatprep.subr.mxu0 0.0
    %261 = vmatpush1.msra.mxu0 %v211
    %262 = vmatprep.subr.mxu0 0.0
    %263 = vmatpush2.msra.mxu0 0.0
    %264 = vmatprep.subr.mxu0 0.0
    %265 = vmatpush2.msra.mxu0 0.0
    %266 = vmatprep.subr.mxu0 0.0
    %267 = vmatpush2.msra.mxu0 0.0
    %268 = vmatprep.subr.mxu0 0.0
    %269 = vmatpush2.msra.mxu0 0.0
    %270 = vmatprep.subr.mxu0 0.0
    %271 = vmatpush2.msra.mxu0 0.0
    %272 = vmatprep.subr.mxu0 0.0
    %273 = vmatpush2.msra.mxu0 0.0
    %274 = vmatprep.subr.mxu0 0.0
    %275 = vmatpush2.msra.mxu0 0.0
    %276 = vmatprep.subr.mxu0 0.0
    %277 = vmatpush2.msra.mxu0 0.0
    %278 = vmatprep.subr.mxu0 0.0
    %279 = vmatpush2.msra.mxu0 0.0
    %280 = vmatprep.subr.mxu0 0.0
    %281 = vmatpush2.msra.mxu0 0.0
    %282 = vmatprep.subr.mxu0 0.0
    %283 = vmatpush2.msra.mxu0 0.0
    %284 = vmatprep.subr.mxu0 0.0
    %285 = vmatpush2.msra.mxu0 0.0
    %286 = vmatprep.subr.mxu0 0.0
    %287 = vmatpush2.msra.mxu0 0.0
    %288 = vmatprep.subr.mxu0 0.0
    %289 = vmatpush2.msra.mxu0 0.0
    %290 = vmatprep.subr.mxu0 0.0
    %291 = vmatpush2.msra.mxu0 0.0
    %292 = vmatprep.subr.mxu0 0.0
    %293 = vmatpush2.msra.mxu0 0.0
    %294 = vmatprep.mubr.f32.mxu0 0.0
    %295 = vmatmul.mubr.f32.gmra.mxu0 %v228
    %v296 = vpop.f32.mrf.mxu0
    %v297 = vadd.f32 %v224, %v296
    %v298 = vpop.f32.mrf.mxu0
    %299 = vdwg.mxu0
    %v300 = vmax.f32 %v297, 0.0
    %v301 = vld [vmem:[%s8] sm:$0xff]
    %v302 = vld [vmem:[%s8 + $0x8] sm:$0xff]
    %v303 = vld [vmem:[%s8 + $0x10] sm:$0xff]
    %v304 = vld [vmem:[%s8 + $0x18] sm:$0xff]
    %v305 = vld [vmem:[%s9] sm:$0x1]
    %v307 = vlaneseq
    %v308 = vshrl.u32 %v307, 7
    %v309 = vsub.s32 0, %v308
    %v310 = vrot.slane %v305, %v309
    %v313 = vsel %vm55, %v300, 0
    %315 = vmatprep.subr.mxu0 0.0
    %316 = vmatpush1.msra.mxu0 0.0
    %317 = vmatprep.subr.mxu0 0.0
    %318 = vmatpush1.msra.mxu0 0.0
    %319 = vmatprep.subr.mxu0 0.0
    %320 = vmatpush1.msra.mxu0 0.0
    %321 = vmatprep.subr.mxu0 0.0
    %322 = vmatpush1.msra.mxu0 0.0
    %323 = vmatprep.subr.mxu0 0.0
    %324 = vmatpush1.msra.mxu0 0.0
    %325 = vmatprep.subr.mxu0 0.0
    %326 = vmatpush1.msra.mxu0 0.0
    %327 = vmatprep.subr.mxu0 0.0
    %328 = vmatpush1.msra.mxu0 0.0
    %329 = vmatprep.subr.mxu0 0.0
    %330 = vmatpush1.msra.mxu0 0.0
    %331 = vmatprep.subr.mxu0 0.0
    %332 = vmatpush1.msra.mxu0 0.0
    %333 = vmatprep.subr.mxu0 0.0
    %334 = vmatpush1.msra.mxu0 0.0
    %335 = vmatprep.subr.mxu0 0.0
    %336 = vmatpush1.msra.mxu0 0.0
    %337 = vmatprep.subr.mxu0 0.0
    %338 = vmatpush1.msra.mxu0 0.0
    %339 = vmatprep.subr.mxu0 0.0
    %340 = vmatpush1.msra.mxu0 %v304
    %341 = vmatprep.subr.mxu0 0.0
    %342 = vmatpush1.msra.mxu0 %v303
    %343 = vmatprep.subr.mxu0 0.0
    %344 = vmatpush1.msra.mxu0 %v302
    %345 = vmatprep.subr.mxu0 0.0
    %346 = vmatpush1.msra.mxu0 %v301
    %347 = vmatprep.subr.mxu0 0.0
    %348 = vmatpush2.msra.mxu0 0.0
    %349 = vmatprep.subr.mxu0 0.0
    %350 = vmatpush2.msra.mxu0 0.0
    %351 = vmatprep.subr.mxu0 0.0
    %352 = vmatpush2.msra.mxu0 0.0
    %353 = vmatprep.subr.mxu0 0.0
    %354 = vmatpush2.msra.mxu0 0.0
    %355 = vmatprep.subr.mxu0 0.0
    %356 = vmatpush2.msra.mxu0 0.0
    %357 = vmatprep.subr.mxu0 0.0
    %358 = vmatpush2.msra.mxu0 0.0
    %359 = vmatprep.subr.mxu0 0.0
    %360 = vmatpush2.msra.mxu0 0.0
    %361 = vmatprep.subr.mxu0 0.0
    %362 = vmatpush2.msra.mxu0 0.0
    %363 = vmatprep.subr.mxu0 0.0
    %364 = vmatpush2.msra.mxu0 0.0
    %365 = vmatprep.subr.mxu0 0.0
    %366 = vmatpush2.msra.mxu0 0.0
    %367 = vmatprep.subr.mxu0 0.0
    %368 = vmatpush2.msra.mxu0 0.0
    %369 = vmatprep.subr.mxu0 0.0
    %370 = vmatpush2.msra.mxu0 0.0
    %371 = vmatprep.subr.mxu0 0.0
    %372 = vmatpush2.msra.mxu0 0.0
    %373 = vmatprep.subr.mxu0 0.0
    %374 = vmatpush2.msra.mxu0 0.0
    %375 = vmatprep.subr.mxu0 0.0
    %376 = vmatpush2.msra.mxu0 0.0
    %377 = vmatprep.subr.mxu0 0.0
    %378 = vmatpush2.msra.mxu0 0.0
    %379 = vmatprep.mubr.f32.mxu0 0.0
    %380 = vmatmul.mubr.f32.gmra.mxu0 %v313
    %v381 = vpop.f32.mrf.mxu0
    %v382 = vadd.f32 %v310, %v381
    %v383 = vpop.f32.mrf.mxu0
    %384 = vdwg.mxu0
    %v385 = vmax.f32 %v382, 0.0
    %v386 = vld [vmem:[%s10] sm:$0xff]
    %v387 = vld [vmem:[%s10 + $0x8] sm:$0xff]
    %v388 = vld [vmem:[%s10 + $0x10] sm:$0xff]
    %v389 = vld [vmem:[%s10 + $0x18] sm:$0xff]
    %v390 = vld [vmem:[%s11] sm:$0x1]
    %v392 = vlaneseq
    %v393 = vshrl.u32 %v392, 7
    %v394 = vsub.s32 0, %v393
    %v395 = vrot.slane %v390, %v394
    %v398 = vsel %vm55, %v385, 0
    %400 = vmatprep.subr.mxu0 0.0
    %401 = vmatpush1.msra.mxu0 0.0
    %402 = vmatprep.subr.mxu0 0.0
    %403 = vmatpush1.msra.mxu0 0.0
    %404 = vmatprep.subr.mxu0 0.0
    %405 = vmatpush1.msra.mxu0 0.0
    %406 = vmatprep.subr.mxu0 0.0
    %407 = vmatpush1.msra.mxu0 0.0
    %408 = vmatprep.subr.mxu0 0.0
    %409 = vmatpush1.msra.mxu0 0.0
    %410 = vmatprep.subr.mxu0 0.0
    %411 = vmatpush1.msra.mxu0 0.0
    %412 = vmatprep.subr.mxu0 0.0
    %413 = vmatpush1.msra.mxu0 0.0
    %414 = vmatprep.subr.mxu0 0.0
    %415 = vmatpush1.msra.mxu0 0.0
    %416 = vmatprep.subr.mxu0 0.0
    %417 = vmatpush1.msra.mxu0 0.0
    %418 = vmatprep.subr.mxu0 0.0
    %419 = vmatpush1.msra.mxu0 0.0
    %420 = vmatprep.subr.mxu0 0.0
    %421 = vmatpush1.msra.mxu0 0.0
    %422 = vmatprep.subr.mxu0 0.0
    %423 = vmatpush1.msra.mxu0 0.0
    %424 = vmatprep.subr.mxu0 0.0
    %425 = vmatpush1.msra.mxu0 %v389
    %426 = vmatprep.subr.mxu0 0.0
    %427 = vmatpush1.msra.mxu0 %v388
    %428 = vmatprep.subr.mxu0 0.0
    %429 = vmatpush1.msra.mxu0 %v387
    %430 = vmatprep.subr.mxu0 0.0
    %431 = vmatpush1.msra.mxu0 %v386
    %432 = vmatprep.subr.mxu0 0.0
    %433 = vmatpush2.msra.mxu0 0.0
    %434 = vmatprep.subr.mxu0 0.0
    %435 = vmatpush2.msra.mxu0 0.0
    %436 = vmatprep.subr.mxu0 0.0
    %437 = vmatpush2.msra.mxu0 0.0
    %438 = vmatprep.subr.mxu0 0.0
    %439 = vmatpush2.msra.mxu0 0.0
    %440 = vmatprep.subr.mxu0 0.0
    %441 = vmatpush2.msra.mxu0 0.0
    %442 = vmatprep.subr.mxu0 0.0
    %443 = vmatpush2.msra.mxu0 0.0
    %444 = vmatprep.subr.mxu0 0.0
    %445 = vmatpush2.msra.mxu0 0.0
    %446 = vmatprep.subr.mxu0 0.0
    %447 = vmatpush2.msra.mxu0 0.0
    %448 = vmatprep.subr.mxu0 0.0
    %449 = vmatpush2.msra.mxu0 0.0
    %450 = vmatprep.subr.mxu0 0.0
    %451 = vmatpush2.msra.mxu0 0.0
    %452 = vmatprep.subr.mxu0 0.0
    %453 = vmatpush2.msra.mxu0 0.0
    %454 = vmatprep.subr.mxu0 0.0
    %455 = vmatpush2.msra.mxu0 0.0
    %456 = vmatprep.subr.mxu0 0.0
    %457 = vmatpush2.msra.mxu0 0.0
    %458 = vmatprep.subr.mxu0 0.0
    %459 = vmatpush2.msra.mxu0 0.0
    %460 = vmatprep.subr.mxu0 0.0
    %461 = vmatpush2.msra.mxu0 0.0
    %462 = vmatprep.subr.mxu0 0.0
    %463 = vmatpush2.msra.mxu0 0.0
    %464 = vmatprep.mubr.f32.mxu0 0.0
    %465 = vmatmul.mubr.f32.gmra.mxu0 %v398
    %v466 = vpop.f32.mrf.mxu0
    %v467 = vadd.f32 %v395, %v466
    %v468 = vpop.f32.mrf.mxu0
    %469 = vdwg.mxu0
    %v470 = vld [vmem:[%s2] sm:$0x3]
    %v471 = vld [vmem:[%s12] sm:$0x1]
    %v472 = vlaneseq
    %v473 = vand.u32 %v472, 127
    %vm474 = vcmp.ge.s32.totalorder %v473, 0
    %vm475 = vcmp.lt.s32.totalorder %v473, 5
    %vm476 = vmand %vm474, %vm475
    %v477 = vsel %vm476, %v467, -1e+30
    %vm478 = vcmask 74752
    %v479 = vsel %vm478, %v477, -inf
    %480 = vmax.xlane.f32.xlu0 %v479
    %v481 = vpop.xlane.xlu0 %480
    %v482 = vsub.f32 %v477, %v481
    %v483 = vmul.f32 %v482, 1.442695
    %v484 = vpow.pop %v483
    %v485 = vsel %vm478, %v484, 0.0
    %486 = vadd.xlane.f32.xlu0 %v485
    %v487 = vpop.xlane.xlu0 %486
    %v488 = vlog2.pop %v487
    %v489 = vmul.f32 %v488, 0.6931472
    %v490 = vadd.f32 %v481, %v489
    %vm491 = vcmp.eq.s32.totalorder %v473, 0
    %v492 = vsel %vm491, %v470, 0
    %vm493 = vcmask 17408
    %v494 = vsel %vm493, %v492, 0
    %v495 = vand.u32 %v494, 65535
    %v496 = vshrl.u32 %v494, 16
    %v497 = vcvt.s32.f32 %v495
    %v498 = vcvt.s32.f32 %v496
    %499 = vadd.xlane.f32.xlu0 %v497
    %v500 = vpop.xlane.xlu0 %499
    %501 = vadd.xlane.f32.xlu0 %v498
    %v502 = vpop.xlane.xlu0 %501
    %v503 = vcvt.f32.s32 %v500
    %v504 = vcvt.f32.s32 %v502
    %v505 = vshll.u32 %v504, 16
    %v506 = vadd.s32 %v505, %v503
    %vm507 = vcmp.eq.s32.totalorder %v473, %v506
    %v508 = vsel %vm507, 1, 0
    %v509 = vcvt.s32.f32 %v508
    %v510 = vmul.f32 %v509, %v467
    %v511 = vsel %vm478, %v510, 0.0
    %512 = vadd.xlane.f32.xlu0 %v511
    %v513 = vpop.xlane.xlu0 %512
    %v515 = vlaneseq
    %v516 = vshrl.u32 %v515, 7
    %v517 = vsub.s32 0, %v516
    %v518 = vrot.slane %v471, %v517
    %v520 = vmul.f32 %v509, %v518
    %v521 = vsel %vm478, %v520, 0.0
    %522 = vadd.xlane.f32.xlu0 %v521
    %v523 = vpop.xlane.xlu0 %522
    %v524 = vsub.f32 %v490, %v513
    %v525 = vmul.f32 %v523, %v524
    %vm526 = vcmask 1041408
    %v527 = vsel %vm526, %v525, 0.0
    %v528 = vrot.slane %v527, 4
    %v529 = vadd.f32 %v527, %v528
    %v530 = vrot.slane %v529, 2
    %v531 = vadd.f32 %v529, %v530
    %v532 = vrot.slane %v531, 1
    %v533 = vadd.f32 %v531, %v532
    %v534 = vsel %vm526, %v523, 0.0
    %v535 = vrot.slane %v534, 4
    %v536 = vadd.f32 %v534, %v535
    %v537 = vrot.slane %v536, 2
    %v538 = vadd.f32 %v536, %v537
    %v539 = vrot.slane %v538, 1
    %v540 = vadd.f32 %v538, %v539
    %v541 = vrcp.pop %v540
    %v542 = vmul.f32 %v533, %v541
    %v543 = vadd.f32 %v542, 0.0
    %vm544 = vcmp.ge.s32.totalorder %v473, 5
    %vm545 = vcmp.lt.s32.totalorder %v473, 8
    %vm546 = vmand %vm544, %vm545
    %v547 = vsel %vm546, %v467, -1e+30
    %v548 = vsel %vm478, %v547, -inf
    %549 = vmax.xlane.f32.xlu0 %v548
    %v550 = vpop.xlane.xlu0 %549
    %v551 = vsub.f32 %v547, %v550
    %v552 = vmul.f32 %v551, 1.442695
    %v553 = vpow.pop %v552
    %v554 = vsel %vm478, %v553, 0.0
    %555 = vadd.xlane.f32.xlu0 %v554
    %v556 = vpop.xlane.xlu0 %555
    %v557 = vlog2.pop %v556
    %v558 = vmul.f32 %v557, 0.6931472
    %v559 = vadd.f32 %v550, %v558
    %vm560 = vcmp.eq.s32.totalorder %v473, 1
    %v561 = vsel %vm560, %v470, 0
    %v562 = vsel %vm493, %v561, 0
    %v563 = vand.u32 %v562, 65535
    %v564 = vshrl.u32 %v562, 16
    %v565 = vcvt.s32.f32 %v563
    %v566 = vcvt.s32.f32 %v564
    %567 = vadd.xlane.f32.xlu0 %v565
    %v568 = vpop.xlane.xlu0 %567
    %569 = vadd.xlane.f32.xlu0 %v566
    %v570 = vpop.xlane.xlu0 %569
    %v571 = vcvt.f32.s32 %v568
    %v572 = vcvt.f32.s32 %v570
    %v573 = vshll.u32 %v572, 16
    %v574 = vadd.s32 %v573, %v571
    %v575 = vadd.s32 %v574, 5
    %vm576 = vcmp.eq.s32.totalorder %v473, %v575
    %v577 = vsel %vm576, 1, 0
    %v578 = vcvt.s32.f32 %v577
    %v579 = vmul.f32 %v578, %v467
    %v580 = vsel %vm478, %v579, 0.0
    %581 = vadd.xlane.f32.xlu0 %v580
    %v582 = vpop.xlane.xlu0 %581
    %v583 = vmul.f32 %v578, %v518
    %v584 = vsel %vm478, %v583, 0.0
    %585 = vadd.xlane.f32.xlu0 %v584
    %v586 = vpop.xlane.xlu0 %585
    %v587 = vsub.f32 %v559, %v582
    %v588 = vmul.f32 %v586, %v587
    %v589 = vsel %vm526, %v588, 0.0
    %v590 = vrot.slane %v589, 4
    %v591 = vadd.f32 %v589, %v590
    %v592 = vrot.slane %v591, 2
    %v593 = vadd.f32 %v591, %v592
    %v594 = vrot.slane %v593, 1
    %v595 = vadd.f32 %v593, %v594
    %v596 = vsel %vm526, %v586, 0.0
    %v597 = vrot.slane %v596, 4
    %v598 = vadd.f32 %v596, %v597
    %v599 = vrot.slane %v598, 2
    %v600 = vadd.f32 %v598, %v599
    %v601 = vrot.slane %v600, 1
    %v602 = vadd.f32 %v600, %v601
    %v603 = vrcp.pop %v602
    %v604 = vmul.f32 %v595, %v603
    %v605 = vadd.f32 %v543, %v604
    %vm606 = vcmp.ge.s32.totalorder %v473, 8
    %vm607 = vcmp.lt.s32.totalorder %v473, 10
    %vm608 = vmand %vm606, %vm607
    %v609 = vsel %vm608, %v467, -1e+30
    %v610 = vsel %vm478, %v609, -inf
    %611 = vmax.xlane.f32.xlu0 %v610
    %v612 = vpop.xlane.xlu0 %611
    %v613 = vsub.f32 %v609, %v612
    %v614 = vmul.f32 %v613, 1.442695
    %v615 = vpow.pop %v614
    %v616 = vsel %vm478, %v615, 0.0
    %617 = vadd.xlane.f32.xlu0 %v616
    %v618 = vpop.xlane.xlu0 %617
    %v619 = vlog2.pop %v618
    %v620 = vmul.f32 %v619, 0.6931472
    %v621 = vadd.f32 %v612, %v620
    %vm622 = vcmp.eq.s32.totalorder %v473, 2
    %v623 = vsel %vm622, %v470, 0
    %v624 = vsel %vm493, %v623, 0
    %v625 = vand.u32 %v624, 65535
    %v626 = vshrl.u32 %v624, 16
    %v627 = vcvt.s32.f32 %v625
    %v628 = vcvt.s32.f32 %v626
    %629 = vadd.xlane.f32.xlu0 %v627
    %v630 = vpop.xlane.xlu0 %629
    %631 = vadd.xlane.f32.xlu0 %v628
    %v632 = vpop.xlane.xlu0 %631
    %v633 = vcvt.f32.s32 %v630
    %v634 = vcvt.f32.s32 %v632
    %v635 = vshll.u32 %v634, 16
    %v636 = vadd.s32 %v635, %v633
    %v637 = vadd.s32 %v636, 8
    %vm638 = vcmp.eq.s32.totalorder %v473, %v637
    %v639 = vsel %vm638, 1, 0
    %v640 = vcvt.s32.f32 %v639
    %v641 = vmul.f32 %v640, %v467
    %v642 = vsel %vm478, %v641, 0.0
    %643 = vadd.xlane.f32.xlu0 %v642
    %v644 = vpop.xlane.xlu0 %643
    %v645 = vmul.f32 %v640, %v518
    %v646 = vsel %vm478, %v645, 0.0
    %647 = vadd.xlane.f32.xlu0 %v646
    %v648 = vpop.xlane.xlu0 %647
    %v649 = vsub.f32 %v621, %v644
    %v650 = vmul.f32 %v648, %v649
    %v651 = vsel %vm526, %v650, 0.0
    %v652 = vrot.slane %v651, 4
    %v653 = vadd.f32 %v651, %v652
    %v654 = vrot.slane %v653, 2
    %v655 = vadd.f32 %v653, %v654
    %v656 = vrot.slane %v655, 1
    %v657 = vadd.f32 %v655, %v656
    %v658 = vsel %vm526, %v648, 0.0
    %v659 = vrot.slane %v658, 4
    %v660 = vadd.f32 %v658, %v659
    %v661 = vrot.slane %v660, 2
    %v662 = vadd.f32 %v660, %v661
    %v663 = vrot.slane %v662, 1
    %v664 = vadd.f32 %v662, %v663
    %v665 = vrcp.pop %v664
    %v666 = vmul.f32 %v657, %v665
    %v667 = vadd.f32 %v605, %v666
    %vm668 = vcmask 0
    %669 = vst.msk [vmem:[#allocation2] sm:$0x1] %vm668, %v667
    // Predicated region
    $region54: #{inverse_model_forward.1} parent=1 // pred_check
      _
    $region55: #{inverse_model_forward.1} parent=1 // pred_check_branch
      %671 = sbr.rel (0) target = $region57
    $region56: #{inverse_model_forward.1} parent=1 // pred_region
      %s673 = ssub.s32 16, 16
      %674 = vsyncadd [#allocation3], %s673
      %s676 = sshll.u32 [#allocation2], 4
      %s677 = int_to_ptr.vmem [resolvable:$true] %s676
      %679 = dma.vmem_to_hbm [thread:$0]  %s677, 16, %s13, [#allocation3]
    $region57: #{inverse_model_forward.1} parent=1 // pred_fallthru
      _
    // Predicated region
    $region58: #{inverse_model_forward.1} parent=1 // pred_check
      _
    $region59: #{inverse_model_forward.1} parent=1 // pred_check_branch
      %681 = sbr.rel (0) target = $region61
    $region60: #{inverse_model_forward.1} parent=1 // pred_region
      %682 = dma.done [#allocation3], 16
    $region61: #{inverse_model_forward.1} parent=1 // pred_fallthru
      _
    %683 = vsyncpa [#allocation3], 1

</llo_original>
